<compile_context>
chip_gen: v7x
topology: tpu7x:2x2x1
jax: 0.10.0
libtpu: 0.0.40
codegen_flags: <defaults>
</compile_context>

<pallas_src>
import math
from itertools import product

import jax
import jax.numpy as jnp
from jax import lax
from jax.experimental import pallas as pl
from jax.experimental.pallas import tpu as pltpu

_INV_SQRT_2PI = 1.0 / math.sqrt(2.0 * math.pi)
_INV_SQRT_2 = 1.0 / math.sqrt(2.0)
_UPPER_CLAMP = 1.0e8   # float32 path of the torch code (clamp_max(1e8))
_VAR_CLAMP = 1.0e-9    # variance.clamp_min(1e-9)


def _make_ehvi_kernel(m):
    """Build the EHVI kernel for a static number of outcomes m.

    Kernel refs (TILE_B candidates x tile_c cells per step):
      stats_ref : (2m, TILE_B, 1)   rows [0:m] = means, rows [m:2m] = variances
      bnd_ref   : (2m, 1, TILE_C)   rows [0:m] = clamped upper bounds, [m:2m] = lower
      out_ref   : (TILE_B, 1)       EHVI accumulators (resident across cell tiles)
    """

    def kernel(stats_ref, bnd_ref, out_ref):
        c = pl.program_id(1)

        stats = stats_ref[...]                                # (2m, TB, 1)
        mu = stats[:m]                                        # (m, TB, 1)  leading-dim slice: free
        var = jnp.maximum(stats[m:], _VAR_CLAMP)              # (m, TB, 1)
        inv_sigma = lax.rsqrt(var)                            # one EUP rsqrt, no divides
        sigma = var * inv_sigma                               # = sqrt(clamped var)

        # Duplicate along the leading (vreg-granular) dim so upper and lower bounds
        # go through a single fused exp and a single fused erf.
        mu2 = jnp.concatenate([mu, mu], axis=0)               # (2m, TB, 1)
        inv_sigma2 = jnp.concatenate([inv_sigma, inv_sigma], axis=0)

        bnd = bnd_ref[...]                                    # (2m, 1, TC)  cells on lanes
        u = (bnd - mu2) * inv_sigma2                          # (2m, TB, TC)
        pdf = jnp.exp(-0.5 * u * u) * _INV_SQRT_2PI           # single fused exp
        cdf = 0.5 * (1.0 + lax.erf(u * _INV_SQRT_2))          # single fused erf

        upper, lower = bnd[:m], bnd[m:]                       # (m, 1, TC)
        pdf_up, pdf_lo = pdf[:m], pdf[m:]                     # (m, TB, TC)
        cdf_up, cdf_lo = cdf[:m], cdf[m:]

        # psi_ll - psi_lu, algebraically simplified.
        psi_diff = sigma * (pdf_lo - pdf_up) + (mu - lower) * (cdf_up - cdf_lo)
        nu = (upper - lower) * (1.0 - cdf_up)                 # (m, TB, TC)

        # sum over {0,1}^m of products  ==  product over outcomes of (psi_diff + nu)
        f = psi_diff + nu                                     # (m, TB, TC)
        prod = f[0]                                           # (TB, TC)
        for k in range(1, m):                                 # static, m is tiny
            prod = prod * f[k]
        partial = jnp.sum(prod, axis=1, keepdims=True)        # (TB, 1): sum over this cell tile

        @pl.when(c == 0)
        def _():
            out_ref[...] = jnp.zeros_like(out_ref)

        out_ref[...] += partial

    return kernel


def ehvi_pallas(mean, variance, cell_lower, cell_upper, *,
                tile_b=8, tile_c=None, vmem_limit_bytes=32 * 1024 * 1024):
    """EHVI forward: mean/variance (B, m), cell bounds (C, m) -> (B,) float32."""
    mean = jnp.asarray(mean, jnp.float32)
    variance = jnp.asarray(variance, jnp.float32)
    cell_lower = jnp.asarray(cell_lower, jnp.float32)
    cell_upper = jnp.asarray(cell_upper, jnp.float32)

    B, m = mean.shape
    C = cell_lower.shape[0]

    # clamp_max(1e8), exactly as the torch float32 path does before psi/nu
    upper_c = jnp.minimum(cell_upper, _UPPER_CLAMP)

    # --- cell (lane) tiling: always a multiple of 128 lanes ---
    c128 = ((C + 127) // 128) * 128
    if tile_c is None:
        # Keep ~8 live (2m, tile_b, tile_c) f32 intermediates under ~16 MiB so the
        # config fits v5e's 16 MiB default scoped VMEM and v7x's 64 MiB physical.
        vmem_cap_tc = (16 * 1024 * 1024) // (8 * 2 * m * tile_b * 4)
        tile_c = min(c128, 8192, max(128, (vmem_cap_tc // 128) * 128))
    tile_c = max(128, (tile_c // 128) * 128)
    c_pad = ((c128 + tile_c - 1) // tile_c) * tile_c

    # (2m, 1, C_pad): rows [0:m] = clamped upper, rows [m:2m] = lower; cells on lanes.
    # Padded cells have lower == upper == 0 -> psi_diff == nu == 0 -> contribute 0.
    bounds = jnp.concatenate([upper_c.T, cell_lower.T], axis=0)
    if c_pad != C:
        bounds = jnp.pad(bounds, ((0, 0), (0, c_pad - C)))
    bounds = bounds.reshape(2 * m, 1, c_pad)

    # --- batch (sublane) tiling ---
    b_pad = ((B + tile_b - 1) // tile_b) * tile_b
    mean_p = jnp.pad(mean, ((0, b_pad - B), (0, 0)))
    var_p = jnp.pad(variance, ((0, b_pad - B), (0, 0)), constant_values=1.0)
    # Single stats array: rows [0:m] = mean.T, rows [m:2m] = variance.T; batch on sublanes.
    stats = jnp.concatenate([mean_p.T, var_p.T], axis=0).reshape(2 * m, b_pad, 1)

    kernel = _make_ehvi_kernel(m)
    out = pl.pallas_call(
        kernel,
        out_shape=jax.ShapeDtypeStruct((b_pad, 1), jnp.float32),
        grid_spec=pltpu.PrefetchScalarGridSpec(
            num_scalar_prefetch=0,
            grid=(b_pad // tile_b, c_pad // tile_c),
            in_specs=[
                pl.BlockSpec((2 * m, tile_b, 1), lambda b, c: (0, b, 0)),
                pl.BlockSpec((2 * m, 1, tile_c), lambda b, c: (0, 0, c)),
            ],
            out_specs=pl.BlockSpec((tile_b, 1), lambda b, c: (b, 0)),
        ),
        compiler_params=pltpu.CompilerParams(
            dimension_semantics=("parallel", "arbitrary"),
            vmem_limit_bytes=vmem_limit_bytes),
    )(stats, bounds)
    return out[:B, 0]


def ehvi_reference(mean, variance, cell_lower, cell_upper, cross_idx):
    """Pure-JAX transcription of the PyTorch EHVI.forward (explicit 2^m cross product).

    Kept un-factorized on purpose: it is the oracle guarding the kernel's factorization.
    """
    mu = mean[:, None, :]                                        # (B, 1, m)
    sigma = jnp.sqrt(jnp.clip(variance, _VAR_CLAMP))[:, None, :] # (B, 1, m)
    lower = cell_lower[None]                                     # (1, C, m)
    upper = jnp.minimum(cell_upper, _UPPER_CLAMP)[None]          # (1, C, m)

    def norm_pdf(u):
        return jnp.exp(-0.5 * u * u) * _INV_SQRT_2PI

    def norm_cdf(u):
        return 0.5 * (1.0 + lax.erf(u * _INV_SQRT_2))

    u_up = (upper - mu) / sigma
    u_lo = (lower - mu) / sigma
    psi_lu = sigma * norm_pdf(u_up) + (mu - lower) * (1.0 - norm_cdf(u_up))
    psi_ll = sigma * norm_pdf(u_lo) + (mu - lower) * (1.0 - norm_cdf(u_lo))
    nu = (upper - lower) * (1.0 - norm_cdf(u_up))
    psi_diff = psi_ll - psi_lu

    stacked = jnp.stack([psi_diff, nu], axis=-2)                 # (B, C, 2, m)
    idx = jnp.asarray(cross_idx, dtype=jnp.int32)                # (2^m, m)
    gathered = jnp.take_along_axis(
        stacked, jnp.broadcast_to(idx, stacked.shape[:-2] + idx.shape), axis=-2
    )                                                            # (B, C, 2^m, m)
    return gathered.prod(axis=-1).sum(axis=-1).sum(axis=-1)      # (B,)


if __name__ == "__main__":
    key = jax.random.PRNGKey(0)
    k_x, k_wm, k_bm, k_wv = jax.random.split(key, 4)

    d = 6        # design dimension
    m = 2        # number of outcomes
    C = 4        # number of hypercells from the (synthetic) box decomposition
    B = 16       # candidates (each one is an independent torch forward call);
                 # B / TILE_B = 2 so the leading "parallel" grid axis can use both
                 # v7x TensorCores.

    # Candidate design points X: (B, d)
    X = jax.random.normal(k_x, (B, d), dtype=jnp.float32)

    # Deterministic synthetic surrogate playing the role of model.predict(X, eval_MSE=True)
    # TODO(synk): the real GP posterior (model.predict) has no Pallas equivalent here;
    # it is emulated by a deterministic linear surrogate in plain JAX.
    W_mu = jax.random.normal(k_wm, (d, m), dtype=jnp.float32) * 0.5
    b_mu = jax.random.normal(k_bm, (m,), dtype=jnp.float32) * 0.1
    W_v = jax.random.normal(k_wv, (d, m), dtype=jnp.float32) * 0.3
    mean = X @ W_mu + b_mu + 1.5                                 # (B, m)
    MSE = 0.05 + 0.2 * jax.nn.sigmoid(X @ W_v)                   # (B, m), >= 0

    # Synthetic NondominatedPartitioning output: hypercell bounds. Some upper bounds
    # are +inf -> clamped to 1e8 (float32 path), exactly as in the torch module.
    cell_lower = jnp.array(
        [[3.0, 0.0], [2.0, 1.0], [1.0, 2.0], [0.0, 3.0]], dtype=jnp.float32
    )
    cell_upper = jnp.array(
        [[jnp.inf, 1.0], [3.0, 2.0], [2.0, 3.0], [1.0, jnp.inf]], dtype=jnp.float32
    )

    # self._cross_product_indices (reference oracle only; kernel uses the factorized form)
    cross_idx = tuple(product(*[[0, 1] for _ in range(m)]))

    out = ehvi_pallas(mean, MSE, cell_lower, cell_upper)
    out = jax.block_until_ready(out)

    ref = ehvi_reference(mean, MSE, cell_lower, cell_upper, cross_idx)
    assert out.shape == (B,)
    assert jnp.allclose(out, ref, rtol=1e-4, atol=1e-5), (out, ref)

    print("KERNEL_OK")
</pallas_src>

<mosaic_0001>
module attributes {stable_mosaic.version = 11 : i64} {
  func.func @kernel(%arg0: i32, %arg1: i32, %arg2: memref<4x8x1xf32, #tpu.memory_space<vmem>>, %arg3: memref<4x1x128xf32, #tpu.memory_space<vmem>>, %arg4: memref<8x1xf32, #tpu.memory_space<vmem>>) attributes {dimension_semantics = [#tpu.dimension_semantics<parallel>, #tpu.dimension_semantics<arbitrary>], iteration_bounds = array<i64: 2, 1>, scalar_prefetch = 0 : i64, scratch_operands = 0 : i64, tpu.core_type = #tpu.core_type<tc>, window_params = [{transform_indices = @transform_0, window_bounds = array<i64: 4, 8, 1>}, {transform_indices = @transform_1, window_bounds = array<i64: 4, 1, 128>}, {transform_indices = @transform_2, window_bounds = array<i64: 8, 1>}]} {
    %c0 = arith.constant 0 : index
    %c0_0 = arith.constant 0 : index
    %c0_1 = arith.constant 0 : index
    %0 = vector.load %arg2[%c0, %c0_0, %c0_1] : memref<4x8x1xf32, #tpu.memory_space<vmem>>, vector<4x8x1xf32>
    %1 = vector.extract_strided_slice %0 {offsets = [0, 0, 0], sizes = [2, 8, 1], strides = [1, 1, 1]} : vector<4x8x1xf32> to vector<2x8x1xf32>
    %2 = vector.extract_strided_slice %0 {offsets = [2, 0, 0], sizes = [2, 8, 1], strides = [1, 1, 1]} : vector<4x8x1xf32> to vector<2x8x1xf32>
    %cst = arith.constant 9.99999971E-10 : f32
    %3 = vector.broadcast %cst : f32 to vector<2x8x1xf32>
    %4 = arith.maximumf %2, %3 : vector<2x8x1xf32>
    %5 = math.rsqrt %4 : vector<2x8x1xf32>
    %6 = arith.mulf %4, %5 : vector<2x8x1xf32>
    %7 = tpu.concatenate %1, %1 in 0 : vector<2x8x1xf32>, vector<2x8x1xf32> -> vector<4x8x1xf32>
    %8 = tpu.concatenate %5, %5 in 0 : vector<2x8x1xf32>, vector<2x8x1xf32> -> vector<4x8x1xf32>
    %c0_2 = arith.constant 0 : index
    %c0_3 = arith.constant 0 : index
    %c0_4 = arith.constant 0 : index
    %9 = vector.load %arg3[%c0_2, %c0_3, %c0_4] : memref<4x1x128xf32, #tpu.memory_space<vmem>>, vector<4x1x128xf32>
    %10 = vector.broadcast %9 : vector<4x1x128xf32> to vector<4x8x128xf32>
    %11 = vector.broadcast %7 : vector<4x8x1xf32> to vector<4x8x128xf32>
    %12 = arith.subf %10, %11 : vector<4x8x128xf32>
    %13 = vector.broadcast %8 : vector<4x8x1xf32> to vector<4x8x128xf32>
    %14 = arith.mulf %12, %13 : vector<4x8x128xf32>
    %cst_5 = arith.constant -5.000000e-01 : f32
    %15 = vector.broadcast %cst_5 : f32 to vector<4x8x128xf32>
    %16 = arith.mulf %15, %14 : vector<4x8x128xf32>
    %17 = arith.mulf %16, %14 : vector<4x8x128xf32>
    %18 = math.exp %17 : vector<4x8x128xf32>
    %cst_6 = arith.constant 0.398942292 : f32
    %19 = vector.broadcast %cst_6 : f32 to vector<4x8x128xf32>
    %20 = arith.mulf %18, %19 : vector<4x8x128xf32>
    %cst_7 = arith.constant 0.707106769 : f32
    %21 = vector.broadcast %cst_7 : f32 to vector<4x8x128xf32>
    %22 = arith.mulf %14, %21 : vector<4x8x128xf32>
    %23 = math.erf %22 : vector<4x8x128xf32>
    %cst_8 = arith.constant 1.000000e+00 : f32
    %24 = vector.broadcast %cst_8 : f32 to vector<4x8x128xf32>
    %25 = arith.addf %24, %23 : vector<4x8x128xf32>
    %cst_9 = arith.constant 5.000000e-01 : f32
    %26 = vector.broadcast %cst_9 : f32 to vector<4x8x128xf32>
    %27 = arith.mulf %26, %25 : vector<4x8x128xf32>
    %28 = vector.extract_strided_slice %9 {offsets = [0, 0, 0], sizes = [2, 1, 128], strides = [1, 1, 1]} : vector<4x1x128xf32> to vector<2x1x128xf32>
    %29 = vector.extract_strided_slice %9 {offsets = [2, 0, 0], sizes = [2, 1, 128], strides = [1, 1, 1]} : vector<4x1x128xf32> to vector<2x1x128xf32>
    %30 = vector.extract_strided_slice %20 {offsets = [0, 0, 0], sizes = [2, 8, 128], strides = [1, 1, 1]} : vector<4x8x128xf32> to vector<2x8x128xf32>
    %31 = vector.extract_strided_slice %20 {offsets = [2, 0, 0], sizes = [2, 8, 128], strides = [1, 1, 1]} : vector<4x8x128xf32> to vector<2x8x128xf32>
    %32 = vector.extract_strided_slice %27 {offsets = [0, 0, 0], sizes = [2, 8, 128], strides = [1, 1, 1]} : vector<4x8x128xf32> to vector<2x8x128xf32>
    %33 = vector.extract_strided_slice %27 {offsets = [2, 0, 0], sizes = [2, 8, 128], strides = [1, 1, 1]} : vector<4x8x128xf32> to vector<2x8x128xf32>
    %34 = arith.subf %31, %30 : vector<2x8x128xf32>
    %35 = vector.broadcast %6 : vector<2x8x1xf32> to vector<2x8x128xf32>
    %36 = arith.mulf %35, %34 : vector<2x8x128xf32>
    %37 = vector.broadcast %1 : vector<2x8x1xf32> to vector<2x8x128xf32>
    %38 = vector.broadcast %29 : vector<2x1x128xf32> to vector<2x8x128xf32>
    %39 = arith.subf %37, %38 : vector<2x8x128xf32>
    %40 = arith.subf %32, %33 : vector<2x8x128xf32>
    %41 = arith.mulf %39, %40 : vector<2x8x128xf32>
    %42 = arith.addf %36, %41 : vector<2x8x128xf32>
    %43 = arith.subf %28, %29 : vector<2x1x128xf32>
    %cst_10 = arith.constant 1.000000e+00 : f32
    %44 = vector.broadcast %cst_10 : f32 to vector<2x8x128xf32>
    %45 = arith.subf %44, %32 : vector<2x8x128xf32>
    %46 = vector.broadcast %43 : vector<2x1x128xf32> to vector<2x8x128xf32>
    %47 = arith.mulf %46, %45 : vector<2x8x128xf32>
    %48 = arith.addf %42, %47 : vector<2x8x128xf32>
    %49 = vector.extract_strided_slice %48 {offsets = [0, 0, 0], sizes = [1, 8, 128], strides = [1, 1, 1]} : vector<2x8x128xf32> to vector<1x8x128xf32>
    %50 = vector.shape_cast %49 : vector<1x8x128xf32> to vector<8x128xf32>
    %51 = vector.extract_strided_slice %48 {offsets = [1, 0, 0], sizes = [1, 8, 128], strides = [1, 1, 1]} : vector<2x8x128xf32> to vector<1x8x128xf32>
    %52 = vector.shape_cast %51 : vector<1x8x128xf32> to vector<8x128xf32>
    %53 = arith.mulf %50, %52 : vector<8x128xf32>
    %cst_11 = arith.constant dense<0.000000e+00> : vector<8xf32>
    %54 = vector.multi_reduction <add>, %53, %cst_11 [1] : vector<8x128xf32> to vector<8xf32>
    %55 = vector.shape_cast %54 : vector<8xf32> to vector<8x1xf32>
    %c0_i32 = arith.constant 0 : i32
    %56 = arith.cmpi eq, %arg1, %c0_i32 : i32
    %57 = arith.extui %56 : i1 to i32
    %c0_i32_12 = arith.constant 0 : i32
    %58 = arith.cmpi ne, %57, %c0_i32_12 : i32
    scf.if %58 {
      %cst_17 = arith.constant 0.000000e+00 : f32
      %62 = vector.broadcast %cst_17 : f32 to vector<8x1xf32>
      %c0_18 = arith.constant 0 : index
      %c0_19 = arith.constant 0 : index
      %63 = vector.load %arg4[%c0_18, %c0_19] : memref<8x1xf32, #tpu.memory_space<vmem>>, vector<8x1xf32>
      tpu.vector_store %arg4[%c0_18, %c0_19], %62 {strides = array<i32>} : memref<8x1xf32, #tpu.memory_space<vmem>>, vector<8x1xf32>,
    } else {
    }
    %c0_13 = arith.constant 0 : index
    %c0_14 = arith.constant 0 : index
    %59 = vector.load %arg4[%c0_13, %c0_14] : memref<8x1xf32, #tpu.memory_space<vmem>>, vector<8x1xf32>
    %60 = arith.addf %59, %55 : vector<8x1xf32>
    %c0_15 = arith.constant 0 : index
    %c0_16 = arith.constant 0 : index
    %61 = vector.load %arg4[%c0_15, %c0_16] : memref<8x1xf32, #tpu.memory_space<vmem>>, vector<8x1xf32>
    tpu.vector_store %arg4[%c0_15, %c0_16], %60 {strides = array<i32>} : memref<8x1xf32, #tpu.memory_space<vmem>>, vector<8x1xf32>,
    return
  }
  func.func @transform_0(%arg0: i32, %arg1: i32) -> (i32, i32, i32) {
    %c0_i32 = arith.constant 0 : i32
    %c0_i32_0 = arith.constant 0 : i32
    %c0_i32_1 = arith.constant 0 : i32
    return %c0_i32, %arg0, %c0_i32_0 : i32, i32, i32
  }
  func.func @transform_1(%arg0: i32, %arg1: i32) -> (i32, i32, i32) {
    %c0_i32 = arith.constant 0 : i32
    %c0_i32_0 = arith.constant 0 : i32
    %c0_i32_1 = arith.constant 0 : i32
    return %c0_i32, %c0_i32_0, %arg1 : i32, i32, i32
  }
  func.func @transform_2(%arg0: i32, %arg1: i32) -> (i32, i32) {
    %c0_i32 = arith.constant 0 : i32
    %c0_i32_0 = arith.constant 0 : i32
    return %arg0, %c0_i32 : i32, i32
  }
}

</mosaic_0001>

<llo_original>
// kernel: tpu_custom_call.1
$region0: #{tpu_custom_call.1}
  #allocation0 [shape = 'u32[]', space=smem, size = 0x4, offset = 0x4, fixed_abs, tag = 'smem constant byte address 0x4 - core index']
  #allocation1 [shape = 'u32[144,128]{1,0:T(1,128)}', space=vmem, size = 0x12000, scoped, tag = 'internal scratch']
  %s0 = inlined_call_operand.vmem [shape: f32[4,16,1], index: 0, kind: input, shape index: {}]
  %s1 = inlined_call_operand.vmem [shape: f32[4,1,128], index: 1, kind: input, shape index: {}]
  %s2 = inlined_call_operand.vmem [shape: f32[16,1], index: 2, kind: output, shape index: {}]
  %s3 = sld [smem:[#allocation0]]
  $region83: #{tpu_custom_call.1} parent=0
    _
  %s5 = ssub.s32 1, %s3
  %s6 = scalar_select 0, %s5, %s3
  $region1: #{tpu_custom_call.1} parent=0
    #allocation2 [shape = 'u8[32768]{0}', space=vmem, size = 0x8000, scoped, tag = 'input window, operand 0']
    loop: start=0, step=1, limit=4
    $region2: #{tpu_custom_call.1} parent=1 // loop_pre_header
      _
    $region3: #{tpu_custom_call.1} parent=1 // loop_header
      %s8 = sphi 0, %s12
      %p9 = scmp.ge.s32.totalorder %s8, 4
      %s15 = sphi 0, %s27
      %s16 = sphi 0, %s23
      %s17 = sphi 0, %s15
      %s18 = sphi 0, %s16
      %s19 = sphi 0, %s17
      %s20 = sphi 0, %s18
      %s30 = sphi 0, %s32
      %s33 = sphi 0, %s30
      %s34 = sphi 0, %s33
      %s50 = sphi 0, %s34
      %s56 = sphi 0, %s58
      %s59 = sphi 0, %s56
      %s60 = sphi 0, %s59
      %s76 = sphi 0, %s60
      %s82 = sphi 0, %s84
      %s85 = sphi 0, %s82
      %s86 = sphi 0, %s85
      %s102 = sphi 0, %s86
    $region4: #{tpu_custom_call.1} parent=1 // loop_header_branch
      %11 = sbr.rel (%p9) target = $region8
    $region5: #{tpu_custom_call.1} parent=1 // loop_body
      %s13 = ssub.s32 %s8, 1
      %s14 = ssub.s32 %s8, 2
      %s21 = sadd.s32 1, %s16
      %p22 = scmp.ge.s32.totalorder %s21, 1
      %s23 = scalar_select %p22, 0, %s21
      %s24 = sadd.s32 1, %s15
      %s25 = scalar_select %p22, %s24, %s15
      %p26 = scmp.ge.s32.totalorder %s25, 2
      %s27 = scalar_select %p26, 0, %s25
      %s28 = ssub.s32 %s15, %s27
      %p29 = scmp.eq.s32.totalorder %s28, 0
      %s31 = sadd.s32 %s30, 1
      %s32 = scalar_select %p29, %s30, %s31
      %p35 = pneg %p29
      %p36 = scmp.eq.s32.totalorder %s8, 1
      %p37 = por %p35, %p36
      %p38 = scmp.ne.s32.totalorder %s30, %s33
      %p39 = scmp.eq.s32.totalorder %s8, 0
      %p40 = por %p38, %p39
      %p41 = scmp.ne.s32.totalorder %s30, %s33
      %p42 = scmp.eq.s32.totalorder %s13, 1
      %p43 = por %p41, %p42
      %p44 = scmp.ne.s32.totalorder %s33, %s34
      %p45 = scmp.eq.s32.totalorder %s13, 0
      %p46 = por %p44, %p45
      %p47 = scmp.ne.s32.totalorder %s33, %s34
      %p48 = scmp.eq.s32.totalorder %s14, 1
      %p49 = por %p47, %p48
      %p51 = scmp.ne.s32.totalorder %s34, %s50
      %p52 = scmp.eq.s32.totalorder %s14, 0
      %p53 = por %p51, %p52
      %s54 = ssub.s32 %s16, %s23
      %p55 = scmp.eq.s32.totalorder %s54, 0
      %s57 = sadd.s32 %s56, 1
      %s58 = scalar_select %p55, %s56, %s57
      %p61 = pneg %p55
      %p62 = scmp.eq.s32.totalorder %s8, 1
      %p63 = por %p61, %p62
      %p64 = scmp.ne.s32.totalorder %s56, %s59
      %p65 = scmp.eq.s32.totalorder %s8, 0
      %p66 = por %p64, %p65
      %p67 = scmp.ne.s32.totalorder %s56, %s59
      %p68 = scmp.eq.s32.totalorder %s13, 1
      %p69 = por %p67, %p68
      %p70 = scmp.ne.s32.totalorder %s59, %s60
      %p71 = scmp.eq.s32.totalorder %s13, 0
      %p72 = por %p70, %p71
      %p73 = scmp.ne.s32.totalorder %s59, %s60
      %p74 = scmp.eq.s32.totalorder %s14, 1
      %p75 = por %p73, %p74
      %p77 = scmp.ne.s32.totalorder %s60, %s76
      %p78 = scmp.eq.s32.totalorder %s14, 0
      %p79 = por %p77, %p78
      %s80 = ssub.s32 %s15, %s27
      %p81 = scmp.eq.s32.totalorder %s80, 0
      %s83 = sadd.s32 %s82, 1
      %s84 = scalar_select %p81, %s82, %s83
      %p87 = pneg %p81
      %p88 = scmp.eq.s32.totalorder %s8, 1
      %p89 = por %p87, %p88
      %p90 = scmp.ne.s32.totalorder %s82, %s85
      %p91 = scmp.eq.s32.totalorder %s8, 0
      %p92 = por %p90, %p91
      %p93 = scmp.ne.s32.totalorder %s82, %s85
      %p94 = scmp.eq.s32.totalorder %s13, 1
      %p95 = por %p93, %p94
      %p96 = scmp.ne.s32.totalorder %s85, %s86
      %p97 = scmp.eq.s32.totalorder %s13, 0
      %p98 = por %p96, %p97
      %p99 = scmp.ne.s32.totalorder %s85, %s86
      %p100 = scmp.eq.s32.totalorder %s14, 1
      %p101 = por %p99, %p100
      %p103 = scmp.ne.s32.totalorder %s86, %s102
      %p104 = scmp.eq.s32.totalorder %s14, 0
      %p105 = por %p103, %p104
      %p106 = scmp.le.s32.totalorder 1, %s8
      %p107 = scmp.lt.s32.totalorder %s8, 3
      %p108 = pnand %p106, %p107
      %p109 = pneg %p108
      // Predicated region
      $region9: #{tpu_custom_call.1} parent=5 // pred_check
        _
      $region10: #{tpu_custom_call.1} parent=5 // pred_check_branch
        %111 = sbr.rel (%p108) target = $region12
      $region11: #{tpu_custom_call.1} parent=5 // pred_region
        %s112 = ssub.s32 %s8, 1
        // Predicated region
        $region13: #{tpu_custom_call.1} parent=11 // pred_check
          %p113 = pneg %p72
        $region14: #{tpu_custom_call.1} parent=11 // pred_check_branch
          %115 = sbr.rel (%p113) target = $region16
        $region15: #{tpu_custom_call.1} parent=11 // pred_region
          %p116 = scmp.lt.s32.totalorder %s18, 0
          %s117 = scalar_select %p116, %s18, 0
          %s118 = scalar_lea.vmem %s1, %s117
        $region16: #{tpu_custom_call.1} parent=11 // pred_fallthru
          _
      $region12: #{tpu_custom_call.1} parent=5 // pred_fallthru
        _
      %p119 = scmp.lt.s32.totalorder %s8, 2
      // Predicated region
      $region17: #{tpu_custom_call.1} parent=5 // pred_check
        %p120 = pneg %p119
      $region18: #{tpu_custom_call.1} parent=5 // pred_check_branch
        %122 = sbr.rel (%p120) target = $region20
      $region19: #{tpu_custom_call.1} parent=5 // pred_region
        // Predicated region
        $region21: #{tpu_custom_call.1} parent=19 // pred_check
          %p123 = pneg %p40
        $region22: #{tpu_custom_call.1} parent=19 // pred_check_branch
          %125 = sbr.rel (%p123) target = $region24
        $region23: #{tpu_custom_call.1} parent=19 // pred_region
          %s126 = sand.u32 %s30, 1
          %s127 = sand.u32 %s30, 1
          %s128 = smul.addr %s127, 32
          %s129 = scalar_lea.vmem [#allocation2], %s128
          %s130 = smul.addr %s15, 8
          %s131 = scalar_lea.vmem %s0, %s130
          // Predicated region
          $region25: #{tpu_custom_call.1} parent=23 // pred_check
            _
          $region26: #{tpu_custom_call.1} parent=23 // pred_check_branch
            %133 = sbr.rel (0) target = $region28
          $region27: #{tpu_custom_call.1} parent=23 // pred_region
            // Predicated region
            $region29: #{tpu_custom_call.1} parent=27 // pred_check
              _
            $region30: #{tpu_custom_call.1} parent=27 // pred_check_branch
              %135 = sbr.rel (0) target = $region32
            $region31: #{tpu_custom_call.1} parent=27 // pred_region
              // Predicated region
              $region44: #{tpu_custom_call.1} parent=31 // pred_check
                _
              $region45: #{tpu_custom_call.1} parent=31 // pred_check_branch
                %156 = sbr.rel (0) target = $region47
              $region46: #{tpu_custom_call.1} parent=31 // pred_region
                loop: start=0, step=1, limit=1
                $region48: #{tpu_custom_call.1} parent=46 // loop_pre_header
                  _
                $region49: #{tpu_custom_call.1} parent=46 // loop_header
                  %s158 = sphi 0, %s162
                  %p159 = scmp.ge.s32.totalorder %s158, 1
                  %s163 = sphi %s131, %s131
                  %s164 = sphi %s129, %s129
                $region50: #{tpu_custom_call.1} parent=46 // loop_header_branch
                  %161 = sbr.rel (%p159) target = $region54
                $region51: #{tpu_custom_call.1} parent=46 // loop_body
                  %v165 = vld [vmem:[%s163] sm:$0xff]
                  %166 = vst [vmem:[%s164] sm:$0xff] %v165
                  %v167 = vld [vmem:[%s163 + $0x10] sm:$0xff]
                  %168 = vst [vmem:[%s164 + $0x8] sm:$0xff] %v167
                  %v169 = vld [vmem:[%s163 + $0x20] sm:$0xff]
                  %170 = vst [vmem:[%s164 + $0x10] sm:$0xff] %v169
                  %v171 = vld [vmem:[%s163 + $0x30] sm:$0xff]
                  %172 = vst [vmem:[%s164 + $0x18] sm:$0xff] %v171
                $region52: #{tpu_custom_call.1} parent=46 // loop_footer
                  %s162 = sadd.s32 1, %s158
                $region53: #{tpu_custom_call.1} parent=46 // loop_footer_branch
                  %157 = sbr.rel target = $region49
                $region54: #{tpu_custom_call.1} parent=46 // loop_exit
                  _
              $region47: #{tpu_custom_call.1} parent=31 // pred_fallthru
                _
              // Predicated region
              $region55: #{tpu_custom_call.1} parent=31 // pred_check
                _
              $region56: #{tpu_custom_call.1} parent=31 // pred_check_branch
                %174 = sbr.rel target = $region58
              $region57: #{tpu_custom_call.1} parent=31 // pred_region
                _
              $region58: #{tpu_custom_call.1} parent=31 // pred_fallthru
                _
            $region32: #{tpu_custom_call.1} parent=27 // pred_fallthru
              _
            // Predicated region
            $region33: #{tpu_custom_call.1} parent=27 // pred_check
              _
            $region34: #{tpu_custom_call.1} parent=27 // pred_check_branch
              %137 = sbr.rel target = $region36
            $region35: #{tpu_custom_call.1} parent=27 // pred_region
              loop: start=0, step=1, limit=1
              $region37: #{tpu_custom_call.1} parent=35 // loop_pre_header
                _
              $region38: #{tpu_custom_call.1} parent=35 // loop_header
                %s140 = sphi 0, %s144
                %p141 = scmp.ge.s32.totalorder %s140, 1
                %s145 = sphi %s131, %s131
                %s146 = sphi %s129, %s129
              $region39: #{tpu_custom_call.1} parent=35 // loop_header_branch
                %143 = sbr.rel (%p141) target = $region43
              $region40: #{tpu_custom_call.1} parent=35 // loop_body
                %v147 = vld [vmem:[%s145] sm:$0xff]
                %148 = vst [vmem:[%s146] sm:$0xff] %v147
                %v149 = vld [vmem:[%s145 + $0x10] sm:$0xff]
                %150 = vst [vmem:[%s146 + $0x8] sm:$0xff] %v149
                %v151 = vld [vmem:[%s145 + $0x20] sm:$0xff]
                %152 = vst [vmem:[%s146 + $0x10] sm:$0xff] %v151
                %v153 = vld [vmem:[%s145 + $0x30] sm:$0xff]
                %154 = vst [vmem:[%s146 + $0x18] sm:$0xff] %v153
              $region41: #{tpu_custom_call.1} parent=35 // loop_footer
                %s144 = sadd.s32 1, %s140
              $region42: #{tpu_custom_call.1} parent=35 // loop_footer_branch
                %139 = sbr.rel target = $region38
              $region43: #{tpu_custom_call.1} parent=35 // loop_exit
                _
            $region36: #{tpu_custom_call.1} parent=27 // pred_fallthru
              _
          $region28: #{tpu_custom_call.1} parent=23 // pred_fallthru
            _
          %175 = vnop
        $region24: #{tpu_custom_call.1} parent=19 // pred_fallthru
          _
      $region20: #{tpu_custom_call.1} parent=5 // pred_fallthru
        _
      %p176 = scmp.le.s32.totalorder 1, %s8
      %p177 = scmp.lt.s32.totalorder %s8, 3
      %p178 = pnand %p176, %p177
      %p179 = pneg %p178
      // Predicated region
      $region59: #{tpu_custom_call.1} parent=5 // pred_check
        _
      $region60: #{tpu_custom_call.1} parent=5 // pred_check_branch
        %181 = sbr.rel (%p178) target = $region62
      $region61: #{tpu_custom_call.1} parent=5 // pred_region
        %s182 = ssub.s32 %s8, 1
        %s183 = sand.u32 %s33, 1
        %s184 = sand.u32 %s33, 1
        %s185 = smul.addr %s184, 32
        %s186 = scalar_lea.vmem [#allocation2], %s185
        // Predicated region
        $region63: #{tpu_custom_call.1} parent=61 // pred_check
          %p187 = pneg %p46
        $region64: #{tpu_custom_call.1} parent=61 // pred_check_branch
          %189 = sbr.rel (%p187) target = $region66
        $region65: #{tpu_custom_call.1} parent=61 // pred_region
          _
        $region66: #{tpu_custom_call.1} parent=61 // pred_fallthru
          _
        %s190 = sand.u32 %s33, 1
        %s191 = sand.u32 %s33, 1
        %s192 = smul.addr %s191, 32
        %s193 = scalar_lea.vmem [#allocation2], %s192
        %p194 = pneg %p46
        %p195 = pneg %p43
        %p196 = scmp.lt.s32.totalorder %s18, 0
        %s197 = scalar_select %p196, %s18, 0
        %s198 = scalar_lea.vmem %s1, %s197
        %p199 = pneg %p72
        %p200 = pneg %p69
        %p201 = pneg %p98
        %p202 = pneg %p95
        %p203 = scmp.lt.s32.totalorder %s17, 1
        %s204 = scalar_select %p203, %s17, 1
        %s205 = smul.addr %s204, 8
        %s206 = scalar_lea.vmem %s2, %s205
        %p207 = scmp.lt.s32.totalorder %s18, 0
        %s208 = scalar_select %p207, %s18, 0
        %s209 = scalar_lea.vmem %s1, %s208
        %p210 = scmp.lt.s32.totalorder %s17, 1
        %s211 = scalar_select %p210, %s17, 1
        %s212 = smul.addr %s211, 8
        %s213 = scalar_lea.vmem %s2, %s212
        %v214 = vld [vmem:[%s186] sm:$0xff]
        %v215 = vld [vmem:[%s186 + $0x8] sm:$0xff]
        %v216 = vld [vmem:[%s186 + $0x10] sm:$0xff]
        %v217 = vld [vmem:[%s186 + $0x18] sm:$0xff]
        %v218 = vmax.f32 %v216, 1e-09
        %v219 = vmax.f32 %v217, 1e-09
        %v220 = vrsqrt.pop %v218
        %v221 = vrsqrt.pop %v219
        %v222 = vmul.f32 %v218, %v220
        %v223 = vmul.f32 %v219, %v221
        %v224 = vld [vmem:[%s209] sm:$0x1]
        %v225 = vld [vmem:[%s209 + $0x1] sm:$0x1]
        %v226 = vld [vmem:[%s209 + $0x2] sm:$0x1]
        %v227 = vld [vmem:[%s209 + $0x3] sm:$0x1]
        %v232 = vlaneseq
        %v233 = vshrl.u32 %v232, 7
        %v234 = vsub.s32 0, %v233
        %v235 = vrot.slane %v224, %v234
        %v236 = vlaneseq
        %v237 = vshrl.u32 %v236, 7
        %v238 = vsub.s32 0, %v237
        %v239 = vrot.slane %v225, %v238
        %v240 = vlaneseq
        %v241 = vshrl.u32 %v240, 7
        %v242 = vsub.s32 0, %v241
        %v243 = vrot.slane %v226, %v242
        %v244 = vlaneseq
        %v245 = vshrl.u32 %v244, 7
        %v246 = vsub.s32 0, %v245
        %v247 = vrot.slane %v227, %v246
        %253 = vset.pattern.permute.xlu0 0
        %254 = vperm.xlu0 %253, %v214
        %v255 = vpop.permute.xlu0 %254
        %258 = vset.pattern.permute.xlu0 0
        %259 = vperm.xlu0 %258, %v215
        %v260 = vpop.permute.xlu0 %259
        %v262 = vsub.f32 %v235, %v255
        %v263 = vsub.f32 %v239, %v260
        %v264 = vsub.f32 %v243, %v255
        %v265 = vsub.f32 %v247, %v260
        %267 = vset.pattern.permute.xlu0 0
        %268 = vperm.xlu0 %267, %v220
        %v269 = vpop.permute.xlu0 %268
        %272 = vset.pattern.permute.xlu0 0
        %273 = vperm.xlu0 %272, %v221
        %v274 = vpop.permute.xlu0 %273
        %v276 = vmul.f32 %v262, %v269
        %v277 = vmul.f32 %v263, %v274
        %v278 = vmul.f32 %v264, %v269
        %v279 = vmul.f32 %v265, %v274
        %v280 = vmul.f32 %v276, -0.5
        %v281 = vmul.f32 %v277, -0.5
        %v282 = vmul.f32 %v278, -0.5
        %v283 = vmul.f32 %v279, -0.5
        %v284 = vmul.f32 %v280, %v276
        %v285 = vmul.f32 %v281, %v277
        %v286 = vmul.f32 %v282, %v278
        %v287 = vmul.f32 %v283, %v279
        %v288 = vmul.f32 %v284, 1.442695
        %v289 = vpow.pop %v288
        %v290 = vmul.f32 %v285, 1.442695
        %v291 = vpow.pop %v290
        %v292 = vmul.f32 %v286, 1.442695
        %v293 = vpow.pop %v292
        %v294 = vmul.f32 %v287, 1.442695
        %v295 = vpow.pop %v294
        %v296 = vmul.f32 %v289, 0.3989423
        %v297 = vmul.f32 %v291, 0.3989423
        %v298 = vmul.f32 %v293, 0.3989423
        %v299 = vmul.f32 %v295, 0.3989423
        %v300 = vmul.f32 %v276, 0.70710677
        %v301 = vmul.f32 %v277, 0.70710677
        %v302 = vmul.f32 %v278, 0.70710677
        %v303 = vmul.f32 %v279, 0.70710677
        %v304 = verf.f32.pop %v300
        %v305 = verf.f32.pop %v301
        %v306 = verf.f32.pop %v302
        %v307 = verf.f32.pop %v303
        %v308 = vadd.f32 %v304, 1.0
        %v309 = vadd.f32 %v305, 1.0
        %v310 = vadd.f32 %v306, 1.0
        %v311 = vadd.f32 %v307, 1.0
        %v312 = vmul.f32 %v308, 0.5
        %v313 = vmul.f32 %v309, 0.5
        %v314 = vmul.f32 %v310, 0.5
        %v315 = vmul.f32 %v311, 0.5
        %v316 = vsub.f32 %v298, %v296
        %v317 = vsub.f32 %v299, %v297
        %319 = vset.pattern.permute.xlu0 0
        %320 = vperm.xlu0 %319, %v222
        %v321 = vpop.permute.xlu0 %320
        %324 = vset.pattern.permute.xlu0 0
        %325 = vperm.xlu0 %324, %v223
        %v326 = vpop.permute.xlu0 %325
        %v328 = vmul.f32 %v321, %v316
        %v329 = vmul.f32 %v326, %v317
        %v330 = vsub.f32 %v255, %v243
        %v331 = vsub.f32 %v260, %v247
        %v332 = vsub.f32 %v312, %v314
        %v333 = vsub.f32 %v313, %v315
        %v334 = vmul.f32 %v330, %v332
        %v335 = vmul.f32 %v331, %v333
        %v336 = vadd.f32 %v328, %v334
        %v337 = vadd.f32 %v329, %v335
        %v338 = vsub.f32 %v224, %v226
        %v339 = vsub.f32 %v225, %v227
        %v340 = vsub.f32 1.0, %v312
        %v341 = vsub.f32 1.0, %v313
        %v344 = vlaneseq
        %v345 = vshrl.u32 %v344, 7
        %v346 = vsub.s32 0, %v345
        %v347 = vrot.slane %v338, %v346
        %v348 = vlaneseq
        %v349 = vshrl.u32 %v348, 7
        %v350 = vsub.s32 0, %v349
        %v351 = vrot.slane %v339, %v350
        %v354 = vmul.f32 %v347, %v340
        %v355 = vmul.f32 %v351, %v341
        %v356 = vadd.f32 %v336, %v354
        %v357 = vadd.f32 %v337, %v355
        %v358 = vmul.f32 %v356, %v357
        %359 = vadd.xlane.f32.xlu0 %v358
        %v360 = vpop.xlane.xlu0 %359
        %p361 = scmp.eq.s32.totalorder %s18, 0
        // Predicated region
        $region67: #{tpu_custom_call.1} parent=61 // pred_check
          %p362 = pneg %p361
        $region68: #{tpu_custom_call.1} parent=61 // pred_check_branch
          %364 = sbr.rel (%p362) target = $region70
        $region69: #{tpu_custom_call.1} parent=61 // pred_region
          %vm365 = vcmask 7168
          %366 = vst.msk [vmem:[%s213] sm:$0xff] %vm365, 0.0
        $region70: #{tpu_custom_call.1} parent=61 // pred_fallthru
          _
        %v367 = vld [vmem:[%s213] sm:$0xff]
        %v368 = vadd.f32 %v367, %v360
        %vm369 = vcmask 7168
        %370 = vst.msk [vmem:[%s213] sm:$0xff] %vm369, %v368
        %p371 = scmp.lt.s32.totalorder %s17, 1
        %s372 = scalar_select %p371, %s17, 1
        %s373 = smul.addr %s372, 8
        %s374 = scalar_lea.vmem %s2, %s373
        // Predicated region
        $region71: #{tpu_custom_call.1} parent=61 // pred_check
          %p375 = pneg %p95
        $region72: #{tpu_custom_call.1} parent=61 // pred_check_branch
          %377 = sbr.rel (%p375) target = $region74
        $region73: #{tpu_custom_call.1} parent=61 // pred_region
          _
        $region74: #{tpu_custom_call.1} parent=61 // pred_fallthru
          _
      $region62: #{tpu_custom_call.1} parent=5 // pred_fallthru
        _
      %p378 = scmp.le.s32.totalorder 2, %s8
      // Predicated region
      $region75: #{tpu_custom_call.1} parent=5 // pred_check
        %p379 = pneg %p378
      $region76: #{tpu_custom_call.1} parent=5 // pred_check_branch
        %381 = sbr.rel (%p379) target = $region78
      $region77: #{tpu_custom_call.1} parent=5 // pred_region
        %s382 = ssub.s32 %s8, 2
        // Predicated region
        $region79: #{tpu_custom_call.1} parent=77 // pred_check
          %p383 = pneg %p101
        $region80: #{tpu_custom_call.1} parent=77 // pred_check_branch
          %385 = sbr.rel (%p383) target = $region82
        $region81: #{tpu_custom_call.1} parent=77 // pred_region
          %p386 = scmp.lt.s32.totalorder %s19, 1
          %s387 = scalar_select %p386, %s19, 1
          %s388 = smul.addr %s387, 8
          %s389 = scalar_lea.vmem %s2, %s388
        $region82: #{tpu_custom_call.1} parent=77 // pred_fallthru
          _
      $region78: #{tpu_custom_call.1} parent=5 // pred_fallthru
        _
    $region6: #{tpu_custom_call.1} parent=1 // loop_footer
      %s12 = sadd.s32 1, %s8
    $region7: #{tpu_custom_call.1} parent=1 // loop_footer_branch
      %7 = sbr.rel target = $region3
    $region8: #{tpu_custom_call.1} parent=1 // loop_exit
      _

</llo_original>
